<compile_context>
chip_gen: v5e
topology: v5e:2x2
jax: 0.10.0
libtpu: 0.0.40
codegen_flags: <defaults>
</compile_context>

<pallas_src>
import jax
import jax.numpy as jnp
import numpy as np
from jax.experimental import pallas as pl
from jax.experimental.pallas import tpu as pltpu

SMOOTH = 1e-5       # soft_dice_kwargs['smooth']
DO_BG = False       # soft_dice_kwargs['do_bg']
WEIGHT_CE = 1.0
WEIGHT_DICE = 1.0
LANES = 128
# ignore_label = None -> CE branch is unconditional, no ignore_index handling needed.
# TODO(synk): SoftDiceLoss(ddp=True) does an AllGather of tp/fp/fn; single-device no-op here.


def _dc_ce_kernel(logits_ref, tgt_ref, dstats_ref, cestats_ref, ce_acc, msk_acc):
    b = pl.program_id(1)
    nb = pl.num_programs(1)
    C = logits_ref.shape[1]

    @pl.when(b == 0)
    def _init():
        ce_acc[...] = jnp.zeros_like(ce_acc)
        msk_acc[...] = jnp.zeros_like(msk_acc)

    labels = tgt_ref[0, 0].astype(jnp.float32)      # (R, 128) integer class ids (as float)
    mask = tgt_ref[0, 1].astype(jnp.float32)        # (R, 128) {0, 1}

    # --- softmax over the channel axis (dim=1 of NCHW); channels as a short loop ---
    x = [logits_ref[0, c].astype(jnp.float32) for c in range(C)]   # C x (R, 128)
    m = x[0]
    for c in range(1, C):
        m = jnp.maximum(m, x[c])
    ex = [jnp.exp(x[c] - m) for c in range(C)]
    se = ex[0]
    for c in range(1, C):
        se = se + ex[c]
    inv_se = pl.reciprocal(se)                      # exact; EUP slot, frees VALU
    log_z = m + jnp.log(se)                         # per-pixel log-sum-exp

    # --- per-class soft-dice partial stats + gather of the logit at the label ---
    sel = jnp.zeros_like(m)
    for c in range(C):
        is_c = labels == float(c)                   # one-hot row c (no iota / no 2nd one-hot)
        sel = jnp.where(is_c, x[c], sel)            # logits[label]
        ohm = jnp.where(is_c, mask, 0.0)            # one-hot * loss_mask
        pm = (ex[c] * inv_se) * mask                # probs_c * loss_mask         (= tp + fp)
        tp = jnp.where(is_c, pm, 0.0)               # probs_c * one-hot * mask
        # per-lane partial sums; lane reduction + cross-tile sum happen in the JAX epilogue
        dstats_ref[0, 0, c:c + 1, :] = jnp.sum(tp, axis=0, keepdims=True)
        dstats_ref[0, 0, C + c:C + c + 1, :] = jnp.sum(pm, axis=0, keepdims=True)
        dstats_ref[0, 0, 2 * C + c:2 * C + c + 1, :] = jnp.sum(ohm, axis=0, keepdims=True)

    # --- per-pixel CE (reduction='none'), accumulated over the batch axis ---
    ce_acc[...] += log_z - sel
    msk_acc[...] += mask

    @pl.when(b == nb - 1)
    def _finalize():
        # torch: (ce[B,H,W] * mask[B,1,H,W]).sum() broadcasts to (B,B,H,W); per pixel the
        # sum factors into (sum_b ce) * (sum_b mask).
        cestats_ref[0, 0:1, :] = jnp.sum(ce_acc[...] * msk_acc[...], axis=0, keepdims=True)
        cestats_ref[0, 1:2, :] = jnp.sum(msk_acc[...], axis=0, keepdims=True)


def dc_and_ce_loss_cascaded_mask(net_output, target, *, tile_rows=512):
    """net_output: (B, C, H, W) logits (f32 or bf16); target: (B, 2, H, W) [labels, mask].

    Transport keeps the caller's dtype (bf16 recommended for the logits stream); all
    in-kernel math is float32. `tile_rows` (x128 lanes) is the spatial tile; 512 keeps
    well under the default scoped VMEM on v5e/v6e/v7x, raise for bigger patches if desired.
    """
    B, C, H, W = net_output.shape
    HW = H * W

    rows = -(-HW // LANES)                                # ceil(HW / 128)
    tr = max(8, min(int(tile_rows), -(-rows // 8) * 8))   # tile rows, multiple of 8
    tr = (tr // 8) * 8
    n_rows = -(-rows // tr) * tr                          # pad rows to a tile multiple
    num_tiles = n_rows // tr
    hw_pad = n_rows * LANES

    logits = net_output.reshape(B, C, HW)
    tgt = target.reshape(B, 2, HW)
    if hw_pad != HW:
        # zero padding is exact: padded pixels carry mask == 0, so they contribute nothing.
        logits = jnp.pad(logits, ((0, 0), (0, 0), (0, hw_pad - HW)))
        tgt = jnp.pad(tgt, ((0, 0), (0, 0), (0, hw_pad - HW)))
    logits = logits.reshape(B, C, n_rows, LANES)
    tgt = tgt.reshape(B, 2, n_rows, LANES)

    dstats, cestats = pl.pallas_call(
        _dc_ce_kernel,
        out_shape=(
            jax.ShapeDtypeStruct((num_tiles, B, 3 * C, LANES), jnp.float32),
            jax.ShapeDtypeStruct((num_tiles, 2, LANES), jnp.float32),
        ),
        grid=(num_tiles, B),
        in_specs=[
            pl.BlockSpec((1, C, tr, LANES), lambda t, b: (b, 0, t, 0)),
            pl.BlockSpec((1, 2, tr, LANES), lambda t, b: (b, 0, t, 0)),
        ],
        out_specs=(
            pl.BlockSpec((1, 1, 3 * C, LANES), lambda t, b: (t, b, 0, 0)),
            pl.BlockSpec((1, 2, LANES), lambda t, b: (t, 0, 0)),
        ),
        scratch_shapes=[
            pltpu.VMEM((tr, LANES), jnp.float32),    # sum over batch of per-pixel CE
            pltpu.VMEM((tr, LANES), jnp.float32),    # sum over batch of per-pixel mask
        ],
        compiler_params=pltpu.CompilerParams(
            dimension_semantics=("parallel", "arbitrary")),
    )(logits, tgt)

    # --- tiny epilogue in plain JAX: fold per-tile / per-lane partials (O(T*B*C) work) ---
    st = jnp.sum(dstats, axis=(0, 3))                 # (B, 3C)
    tp = st[:, 0:C]
    pm = st[:, C:2 * C]                               # = tp + fp
    om = st[:, 2 * C:3 * C]                           # = tp + fn
    dc = (2.0 * tp + SMOOTH) / jnp.maximum(pm + om + SMOOTH, 1e-8)
    dc_fg = dc if DO_BG else dc[:, 1:]
    dc_loss = -jnp.mean(dc_fg)

    cs = jnp.sum(cestats, axis=(0, 2))                # [sum_hw(ce_sum * mask_sum), sum(mask)]
    ce_loss = cs[0] / cs[1]
    return WEIGHT_CE * ce_loss + WEIGHT_DICE * dc_loss


def reference(net_output, target):
    """Pure-JAX mirror of the PyTorch forward (for verification)."""
    mask = target[:, 1:2]
    t = target[:, 0:1]
    target_dice = mask * t
    C = net_output.shape[1]
    p = jax.nn.softmax(net_output, axis=1)
    oh = jax.nn.one_hot(target_dice[:, 0].astype(jnp.int32), C, axis=1, dtype=jnp.float32)
    tp = jnp.sum(p * oh * mask, axis=(2, 3))
    fp = jnp.sum(p * (1 - oh) * mask, axis=(2, 3))
    fn = jnp.sum((1 - p) * oh * mask, axis=(2, 3))
    dc = (2 * tp + SMOOTH) / jnp.maximum(2 * tp + fp + fn + SMOOTH, 1e-8)
    dc_loss = -jnp.mean(dc[:, 1:] if not DO_BG else dc)
    logp = jax.nn.log_softmax(net_output, axis=1)
    lab = t[:, 0].astype(jnp.int32)
    ce = -jnp.take_along_axis(logp, lab[:, None], axis=1)[:, 0]     # (B, H, W)
    ce_loss = jnp.sum(ce * mask) / jnp.sum(mask)                    # (B,B,H,W) broadcast as in torch
    return WEIGHT_CE * ce_loss + WEIGHT_DICE * dc_loss


if __name__ == "__main__":
    key = jax.random.PRNGKey(0)
    k1, k2, k3 = jax.random.split(key, 3)
    B, C, H, W = 2, 4, 16, 16
    net_output = jax.random.normal(k1, (B, C, H, W), dtype=jnp.float32)
    labels = jax.random.randint(k2, (B, 1, H, W), 0, C).astype(jnp.float32)
    mask = (jax.random.uniform(k3, (B, 1, H, W)) > 0.3).astype(jnp.float32)
    target = jnp.concatenate([labels, mask], axis=1)   # (B, 2, H, W)

    # bf16 transport (halves the dominant logits HBM stream); labels {0..C-1} and the
    # {0,1} mask are exact in bf16. All in-kernel math stays f32.
    net_bf16 = net_output.astype(jnp.bfloat16)
    tgt_bf16 = target.astype(jnp.bfloat16)

    loss = dc_and_ce_loss_cascaded_mask(net_bf16, tgt_bf16)
    loss = jax.block_until_ready(loss)

    # reference computed from the same (bf16-rounded) logits, in f32.
    ref = reference(net_bf16.astype(jnp.float32), target)
    assert np.allclose(np.asarray(loss), np.asarray(ref), rtol=1e-4, atol=1e-4), (loss, ref)
    print("KERNEL_OK")
</pallas_src>

<mosaic_0001>
module attributes {stable_mosaic.version = 11 : i64} {
  func.func @_dc_ce_kernel(%arg0: i32, %arg1: i32, %arg2: memref<1x4x8x128xbf16, #tpu.memory_space<vmem>>, %arg3: memref<1x2x8x128xbf16, #tpu.memory_space<vmem>>, %arg4: memref<1x1x12x128xf32, #tpu.memory_space<vmem>>, %arg5: memref<1x2x128xf32, #tpu.memory_space<vmem>>, %arg6: memref<8x128xf32, #tpu.memory_space<vmem>>, %arg7: memref<8x128xf32, #tpu.memory_space<vmem>>) attributes {dimension_semantics = [#tpu.dimension_semantics<parallel>, #tpu.dimension_semantics<arbitrary>], iteration_bounds = array<i64: 1, 2>, scalar_prefetch = 0 : i64, scratch_operands = 2 : i64, tpu.core_type = #tpu.core_type<tc>, window_params = [{transform_indices = @transform_0, window_bounds = array<i64: 1, 4, 8, 128>}, {transform_indices = @transform_1, window_bounds = array<i64: 1, 2, 8, 128>}, {transform_indices = @transform_2, window_bounds = array<i64: 1, 1, 12, 128>}, {transform_indices = @transform_3, window_bounds = array<i64: 1, 2, 128>}]} {
    %c0_i32 = arith.constant 0 : i32
    %0 = arith.cmpi eq, %arg1, %c0_i32 : i32
    %1 = arith.extui %0 : i1 to i32
    %c0_i32_0 = arith.constant 0 : i32
    %2 = arith.cmpi ne, %1, %c0_i32_0 : i32
    scf.if %2 {
      %cst_94 = arith.constant 0.000000e+00 : f32
      %145 = vector.broadcast %cst_94 : f32 to vector<8x128xf32>
      %c0_95 = arith.constant 0 : index
      %c0_96 = arith.constant 0 : index
      %146 = vector.load %arg6[%c0_95, %c0_96] : memref<8x128xf32, #tpu.memory_space<vmem>>, vector<8x128xf32>
      tpu.vector_store %arg6[%c0_95, %c0_96], %145 {strides = array<i32>} : memref<8x128xf32, #tpu.memory_space<vmem>>, vector<8x128xf32>,
      %cst_97 = arith.constant 0.000000e+00 : f32
      %147 = vector.broadcast %cst_97 : f32 to vector<8x128xf32>
      %c0_98 = arith.constant 0 : index
      %c0_99 = arith.constant 0 : index
      %148 = vector.load %arg7[%c0_98, %c0_99] : memref<8x128xf32, #tpu.memory_space<vmem>>, vector<8x128xf32>
      tpu.vector_store %arg7[%c0_98, %c0_99], %147 {strides = array<i32>} : memref<8x128xf32, #tpu.memory_space<vmem>>, vector<8x128xf32>,
    } else {
    }
    %c0 = arith.constant 0 : index
    %c0_1 = arith.constant 0 : index
    %c0_2 = arith.constant 0 : index
    %c0_3 = arith.constant 0 : index
    %3 = vector.load %arg3[%c0, %c0_1, %c0_2, %c0_3] : memref<1x2x8x128xbf16, #tpu.memory_space<vmem>>, vector<1x1x8x128xbf16>
    %4 = vector.shape_cast %3 : vector<1x1x8x128xbf16> to vector<8x128xbf16>
    %5 = arith.extf %4 : vector<8x128xbf16> to vector<8x128xf32>
    %c0_4 = arith.constant 0 : index
    %c1 = arith.constant 1 : index
    %c0_5 = arith.constant 0 : index
    %c0_6 = arith.constant 0 : index
    %6 = vector.load %arg3[%c0_4, %c1, %c0_5, %c0_6] : memref<1x2x8x128xbf16, #tpu.memory_space<vmem>>, vector<1x1x8x128xbf16>
    %7 = vector.shape_cast %6 : vector<1x1x8x128xbf16> to vector<8x128xbf16>
    %8 = arith.extf %7 : vector<8x128xbf16> to vector<8x128xf32>
    %c0_7 = arith.constant 0 : index
    %c0_8 = arith.constant 0 : index
    %c0_9 = arith.constant 0 : index
    %c0_10 = arith.constant 0 : index
    %9 = vector.load %arg2[%c0_7, %c0_8, %c0_9, %c0_10] : memref<1x4x8x128xbf16, #tpu.memory_space<vmem>>, vector<1x1x8x128xbf16>
    %10 = vector.shape_cast %9 : vector<1x1x8x128xbf16> to vector<8x128xbf16>
    %11 = arith.extf %10 : vector<8x128xbf16> to vector<8x128xf32>
    %c0_11 = arith.constant 0 : index
    %c1_12 = arith.constant 1 : index
    %c0_13 = arith.constant 0 : index
    %c0_14 = arith.constant 0 : index
    %12 = vector.load %arg2[%c0_11, %c1_12, %c0_13, %c0_14] : memref<1x4x8x128xbf16, #tpu.memory_space<vmem>>, vector<1x1x8x128xbf16>
    %13 = vector.shape_cast %12 : vector<1x1x8x128xbf16> to vector<8x128xbf16>
    %14 = arith.extf %13 : vector<8x128xbf16> to vector<8x128xf32>
    %c0_15 = arith.constant 0 : index
    %c2 = arith.constant 2 : index
    %c0_16 = arith.constant 0 : index
    %c0_17 = arith.constant 0 : index
    %15 = vector.load %arg2[%c0_15, %c2, %c0_16, %c0_17] : memref<1x4x8x128xbf16, #tpu.memory_space<vmem>>, vector<1x1x8x128xbf16>
    %16 = vector.shape_cast %15 : vector<1x1x8x128xbf16> to vector<8x128xbf16>
    %17 = arith.extf %16 : vector<8x128xbf16> to vector<8x128xf32>
    %c0_18 = arith.constant 0 : index
    %c3 = arith.constant 3 : index
    %c0_19 = arith.constant 0 : index
    %c0_20 = arith.constant 0 : index
    %18 = vector.load %arg2[%c0_18, %c3, %c0_19, %c0_20] : memref<1x4x8x128xbf16, #tpu.memory_space<vmem>>, vector<1x1x8x128xbf16>
    %19 = vector.shape_cast %18 : vector<1x1x8x128xbf16> to vector<8x128xbf16>
    %20 = arith.extf %19 : vector<8x128xbf16> to vector<8x128xf32>
    %21 = arith.maximumf %11, %14 : vector<8x128xf32>
    %22 = arith.maximumf %21, %17 : vector<8x128xf32>
    %23 = arith.maximumf %22, %20 : vector<8x128xf32>
    %24 = arith.subf %11, %23 : vector<8x128xf32>
    %25 = math.exp %24 : vector<8x128xf32>
    %26 = arith.subf %14, %23 : vector<8x128xf32>
    %27 = math.exp %26 : vector<8x128xf32>
    %28 = arith.subf %17, %23 : vector<8x128xf32>
    %29 = math.exp %28 : vector<8x128xf32>
    %30 = arith.subf %20, %23 : vector<8x128xf32>
    %31 = math.exp %30 : vector<8x128xf32>
    %32 = arith.addf %25, %27 : vector<8x128xf32>
    %33 = arith.addf %32, %29 : vector<8x128xf32>
    %34 = arith.addf %33, %31 : vector<8x128xf32>
    %35 = tpu.reciprocal %34 : vector<8x128xf32> -> vector<8x128xf32>
    %36 = math.log %34 : vector<8x128xf32>
    %37 = arith.addf %23, %36 : vector<8x128xf32>
    %cst = arith.constant 0.000000e+00 : f32
    %38 = vector.broadcast %cst : f32 to vector<8x128xf32>
    %cst_21 = arith.constant 0.000000e+00 : f32
    %39 = vector.broadcast %cst_21 : f32 to vector<8x128xf32>
    %40 = arith.cmpf oeq, %5, %39 : vector<8x128xf32>
    %41 = arith.select %40, %11, %38 : vector<8x128xi1>, vector<8x128xf32>
    %cst_22 = arith.constant 0.000000e+00 : f32
    %42 = vector.broadcast %cst_22 : f32 to vector<8x128xf32>
    %43 = arith.select %40, %8, %42 : vector<8x128xi1>, vector<8x128xf32>
    %44 = arith.mulf %25, %35 : vector<8x128xf32>
    %45 = arith.mulf %44, %8 : vector<8x128xf32>
    %cst_23 = arith.constant 0.000000e+00 : f32
    %46 = vector.broadcast %cst_23 : f32 to vector<8x128xf32>
    %47 = arith.select %40, %45, %46 : vector<8x128xi1>, vector<8x128xf32>
    %cst_24 = arith.constant dense<0.000000e+00> : vector<128xf32>
    %48 = vector.multi_reduction <add>, %47, %cst_24 [0] : vector<8x128xf32> to vector<128xf32>
    %49 = vector.shape_cast %48 : vector<128xf32> to vector<1x128xf32>
    %c0_25 = arith.constant 0 : index
    %c0_26 = arith.constant 0 : index
    %c0_27 = arith.constant 0 : index
    %c0_28 = arith.constant 0 : index
    %50 = vector.load %arg4[%c0_25, %c0_26, %c0_27, %c0_28] : memref<1x1x12x128xf32, #tpu.memory_space<vmem>>, vector<1x1x1x128xf32>
    %51 = vector.shape_cast %50 : vector<1x1x1x128xf32> to vector<1x128xf32>
    %52 = vector.shape_cast %49 : vector<1x128xf32> to vector<1x1x1x128xf32>
    tpu.vector_store %arg4[%c0_25, %c0_26, %c0_27, %c0_28], %52 {strides = array<i32>} : memref<1x1x12x128xf32, #tpu.memory_space<vmem>>, vector<1x1x1x128xf32>,
    %cst_29 = arith.constant dense<0.000000e+00> : vector<128xf32>
    %53 = vector.multi_reduction <add>, %45, %cst_29 [0] : vector<8x128xf32> to vector<128xf32>
    %54 = vector.shape_cast %53 : vector<128xf32> to vector<1x128xf32>
    %c0_30 = arith.constant 0 : index
    %c0_31 = arith.constant 0 : index
    %c4 = arith.constant 4 : index
    %c0_32 = arith.constant 0 : index
    %55 = vector.load %arg4[%c0_30, %c0_31, %c4, %c0_32] : memref<1x1x12x128xf32, #tpu.memory_space<vmem>>, vector<1x1x1x128xf32>
    %56 = vector.shape_cast %55 : vector<1x1x1x128xf32> to vector<1x128xf32>
    %57 = vector.shape_cast %54 : vector<1x128xf32> to vector<1x1x1x128xf32>
    tpu.vector_store %arg4[%c0_30, %c0_31, %c4, %c0_32], %57 {strides = array<i32>} : memref<1x1x12x128xf32, #tpu.memory_space<vmem>>, vector<1x1x1x128xf32>,
    %cst_33 = arith.constant dense<0.000000e+00> : vector<128xf32>
    %58 = vector.multi_reduction <add>, %43, %cst_33 [0] : vector<8x128xf32> to vector<128xf32>
    %59 = vector.shape_cast %58 : vector<128xf32> to vector<1x128xf32>
    %c0_34 = arith.constant 0 : index
    %c0_35 = arith.constant 0 : index
    %c8 = arith.constant 8 : index
    %c0_36 = arith.constant 0 : index
    %60 = vector.load %arg4[%c0_34, %c0_35, %c8, %c0_36] : memref<1x1x12x128xf32, #tpu.memory_space<vmem>>, vector<1x1x1x128xf32>
    %61 = vector.shape_cast %60 : vector<1x1x1x128xf32> to vector<1x128xf32>
    %62 = vector.shape_cast %59 : vector<1x128xf32> to vector<1x1x1x128xf32>
    tpu.vector_store %arg4[%c0_34, %c0_35, %c8, %c0_36], %62 {strides = array<i32>} : memref<1x1x12x128xf32, #tpu.memory_space<vmem>>, vector<1x1x1x128xf32>,
    %cst_37 = arith.constant 1.000000e+00 : f32
    %63 = vector.broadcast %cst_37 : f32 to vector<8x128xf32>
    %64 = arith.cmpf oeq, %5, %63 : vector<8x128xf32>
    %65 = arith.select %64, %14, %41 : vector<8x128xi1>, vector<8x128xf32>
    %cst_38 = arith.constant 0.000000e+00 : f32
    %66 = vector.broadcast %cst_38 : f32 to vector<8x128xf32>
    %67 = arith.select %64, %8, %66 : vector<8x128xi1>, vector<8x128xf32>
    %68 = arith.mulf %27, %35 : vector<8x128xf32>
    %69 = arith.mulf %68, %8 : vector<8x128xf32>
    %cst_39 = arith.constant 0.000000e+00 : f32
    %70 = vector.broadcast %cst_39 : f32 to vector<8x128xf32>
    %71 = arith.select %64, %69, %70 : vector<8x128xi1>, vector<8x128xf32>
    %cst_40 = arith.constant dense<0.000000e+00> : vector<128xf32>
    %72 = vector.multi_reduction <add>, %71, %cst_40 [0] : vector<8x128xf32> to vector<128xf32>
    %73 = vector.shape_cast %72 : vector<128xf32> to vector<1x128xf32>
    %c0_41 = arith.constant 0 : index
    %c0_42 = arith.constant 0 : index
    %c1_43 = arith.constant 1 : index
    %c0_44 = arith.constant 0 : index
    %74 = vector.load %arg4[%c0_41, %c0_42, %c1_43, %c0_44] : memref<1x1x12x128xf32, #tpu.memory_space<vmem>>, vector<1x1x1x128xf32>
    %75 = vector.shape_cast %74 : vector<1x1x1x128xf32> to vector<1x128xf32>
    %76 = vector.shape_cast %73 : vector<1x128xf32> to vector<1x1x1x128xf32>
    tpu.vector_store %arg4[%c0_41, %c0_42, %c1_43, %c0_44], %76 {strides = array<i32>} : memref<1x1x12x128xf32, #tpu.memory_space<vmem>>, vector<1x1x1x128xf32>,
    %cst_45 = arith.constant dense<0.000000e+00> : vector<128xf32>
    %77 = vector.multi_reduction <add>, %69, %cst_45 [0] : vector<8x128xf32> to vector<128xf32>
    %78 = vector.shape_cast %77 : vector<128xf32> to vector<1x128xf32>
    %c0_46 = arith.constant 0 : index
    %c0_47 = arith.constant 0 : index
    %c5 = arith.constant 5 : index
    %c0_48 = arith.constant 0 : index
    %79 = vector.load %arg4[%c0_46, %c0_47, %c5, %c0_48] : memref<1x1x12x128xf32, #tpu.memory_space<vmem>>, vector<1x1x1x128xf32>
    %80 = vector.shape_cast %79 : vector<1x1x1x128xf32> to vector<1x128xf32>
    %81 = vector.shape_cast %78 : vector<1x128xf32> to vector<1x1x1x128xf32>
    tpu.vector_store %arg4[%c0_46, %c0_47, %c5, %c0_48], %81 {strides = array<i32>} : memref<1x1x12x128xf32, #tpu.memory_space<vmem>>, vector<1x1x1x128xf32>,
    %cst_49 = arith.constant dense<0.000000e+00> : vector<128xf32>
    %82 = vector.multi_reduction <add>, %67, %cst_49 [0] : vector<8x128xf32> to vector<128xf32>
    %83 = vector.shape_cast %82 : vector<128xf32> to vector<1x128xf32>
    %c0_50 = arith.constant 0 : index
    %c0_51 = arith.constant 0 : index
    %c9 = arith.constant 9 : index
    %c0_52 = arith.constant 0 : index
    %84 = vector.load %arg4[%c0_50, %c0_51, %c9, %c0_52] : memref<1x1x12x128xf32, #tpu.memory_space<vmem>>, vector<1x1x1x128xf32>
    %85 = vector.shape_cast %84 : vector<1x1x1x128xf32> to vector<1x128xf32>
    %86 = vector.shape_cast %83 : vector<1x128xf32> to vector<1x1x1x128xf32>
    tpu.vector_store %arg4[%c0_50, %c0_51, %c9, %c0_52], %86 {strides = array<i32>} : memref<1x1x12x128xf32, #tpu.memory_space<vmem>>, vector<1x1x1x128xf32>,
    %cst_53 = arith.constant 2.000000e+00 : f32
    %87 = vector.broadcast %cst_53 : f32 to vector<8x128xf32>
    %88 = arith.cmpf oeq, %5, %87 : vector<8x128xf32>
    %89 = arith.select %88, %17, %65 : vector<8x128xi1>, vector<8x128xf32>
    %cst_54 = arith.constant 0.000000e+00 : f32
    %90 = vector.broadcast %cst_54 : f32 to vector<8x128xf32>
    %91 = arith.select %88, %8, %90 : vector<8x128xi1>, vector<8x128xf32>
    %92 = arith.mulf %29, %35 : vector<8x128xf32>
    %93 = arith.mulf %92, %8 : vector<8x128xf32>
    %cst_55 = arith.constant 0.000000e+00 : f32
    %94 = vector.broadcast %cst_55 : f32 to vector<8x128xf32>
    %95 = arith.select %88, %93, %94 : vector<8x128xi1>, vector<8x128xf32>
    %cst_56 = arith.constant dense<0.000000e+00> : vector<128xf32>
    %96 = vector.multi_reduction <add>, %95, %cst_56 [0] : vector<8x128xf32> to vector<128xf32>
    %97 = vector.shape_cast %96 : vector<128xf32> to vector<1x128xf32>
    %c0_57 = arith.constant 0 : index
    %c0_58 = arith.constant 0 : index
    %c2_59 = arith.constant 2 : index
    %c0_60 = arith.constant 0 : index
    %98 = vector.load %arg4[%c0_57, %c0_58, %c2_59, %c0_60] : memref<1x1x12x128xf32, #tpu.memory_space<vmem>>, vector<1x1x1x128xf32>
    %99 = vector.shape_cast %98 : vector<1x1x1x128xf32> to vector<1x128xf32>
    %100 = vector.shape_cast %97 : vector<1x128xf32> to vector<1x1x1x128xf32>
    tpu.vector_store %arg4[%c0_57, %c0_58, %c2_59, %c0_60], %100 {strides = array<i32>} : memref<1x1x12x128xf32, #tpu.memory_space<vmem>>, vector<1x1x1x128xf32>,
    %cst_61 = arith.constant dense<0.000000e+00> : vector<128xf32>
    %101 = vector.multi_reduction <add>, %93, %cst_61 [0] : vector<8x128xf32> to vector<128xf32>
    %102 = vector.shape_cast %101 : vector<128xf32> to vector<1x128xf32>
    %c0_62 = arith.constant 0 : index
    %c0_63 = arith.constant 0 : index
    %c6 = arith.constant 6 : index
    %c0_64 = arith.constant 0 : index
    %103 = vector.load %arg4[%c0_62, %c0_63, %c6, %c0_64] : memref<1x1x12x128xf32, #tpu.memory_space<vmem>>, vector<1x1x1x128xf32>
    %104 = vector.shape_cast %103 : vector<1x1x1x128xf32> to vector<1x128xf32>
    %105 = vector.shape_cast %102 : vector<1x128xf32> to vector<1x1x1x128xf32>
    tpu.vector_store %arg4[%c0_62, %c0_63, %c6, %c0_64], %105 {strides = array<i32>} : memref<1x1x12x128xf32, #tpu.memory_space<vmem>>, vector<1x1x1x128xf32>,
    %cst_65 = arith.constant dense<0.000000e+00> : vector<128xf32>
    %106 = vector.multi_reduction <add>, %91, %cst_65 [0] : vector<8x128xf32> to vector<128xf32>
    %107 = vector.shape_cast %106 : vector<128xf32> to vector<1x128xf32>
    %c0_66 = arith.constant 0 : index
    %c0_67 = arith.constant 0 : index
    %c10 = arith.constant 10 : index
    %c0_68 = arith.constant 0 : index
    %108 = vector.load %arg4[%c0_66, %c0_67, %c10, %c0_68] : memref<1x1x12x128xf32, #tpu.memory_space<vmem>>, vector<1x1x1x128xf32>
    %109 = vector.shape_cast %108 : vector<1x1x1x128xf32> to vector<1x128xf32>
    %110 = vector.shape_cast %107 : vector<1x128xf32> to vector<1x1x1x128xf32>
    tpu.vector_store %arg4[%c0_66, %c0_67, %c10, %c0_68], %110 {strides = array<i32>} : memref<1x1x12x128xf32, #tpu.memory_space<vmem>>, vector<1x1x1x128xf32>,
    %cst_69 = arith.constant 3.000000e+00 : f32
    %111 = vector.broadcast %cst_69 : f32 to vector<8x128xf32>
    %112 = arith.cmpf oeq, %5, %111 : vector<8x128xf32>
    %113 = arith.select %112, %20, %89 : vector<8x128xi1>, vector<8x128xf32>
    %cst_70 = arith.constant 0.000000e+00 : f32
    %114 = vector.broadcast %cst_70 : f32 to vector<8x128xf32>
    %115 = arith.select %112, %8, %114 : vector<8x128xi1>, vector<8x128xf32>
    %116 = arith.mulf %31, %35 : vector<8x128xf32>
    %117 = arith.mulf %116, %8 : vector<8x128xf32>
    %cst_71 = arith.constant 0.000000e+00 : f32
    %118 = vector.broadcast %cst_71 : f32 to vector<8x128xf32>
    %119 = arith.select %112, %117, %118 : vector<8x128xi1>, vector<8x128xf32>
    %cst_72 = arith.constant dense<0.000000e+00> : vector<128xf32>
    %120 = vector.multi_reduction <add>, %119, %cst_72 [0] : vector<8x128xf32> to vector<128xf32>
    %121 = vector.shape_cast %120 : vector<128xf32> to vector<1x128xf32>
    %c0_73 = arith.constant 0 : index
    %c0_74 = arith.constant 0 : index
    %c3_75 = arith.constant 3 : index
    %c0_76 = arith.constant 0 : index
    %122 = vector.load %arg4[%c0_73, %c0_74, %c3_75, %c0_76] : memref<1x1x12x128xf32, #tpu.memory_space<vmem>>, vector<1x1x1x128xf32>
    %123 = vector.shape_cast %122 : vector<1x1x1x128xf32> to vector<1x128xf32>
    %124 = vector.shape_cast %121 : vector<1x128xf32> to vector<1x1x1x128xf32>
    tpu.vector_store %arg4[%c0_73, %c0_74, %c3_75, %c0_76], %124 {strides = array<i32>} : memref<1x1x12x128xf32, #tpu.memory_space<vmem>>, vector<1x1x1x128xf32>,
    %cst_77 = arith.constant dense<0.000000e+00> : vector<128xf32>
    %125 = vector.multi_reduction <add>, %117, %cst_77 [0] : vector<8x128xf32> to vector<128xf32>
    %126 = vector.shape_cast %125 : vector<128xf32> to vector<1x128xf32>
    %c0_78 = arith.constant 0 : index
    %c0_79 = arith.constant 0 : index
    %c7 = arith.constant 7 : index
    %c0_80 = arith.constant 0 : index
    %127 = vector.load %arg4[%c0_78, %c0_79, %c7, %c0_80] : memref<1x1x12x128xf32, #tpu.memory_space<vmem>>, vector<1x1x1x128xf32>
    %128 = vector.shape_cast %127 : vector<1x1x1x128xf32> to vector<1x128xf32>
    %129 = vector.shape_cast %126 : vector<1x128xf32> to vector<1x1x1x128xf32>
    tpu.vector_store %arg4[%c0_78, %c0_79, %c7, %c0_80], %129 {strides = array<i32>} : memref<1x1x12x128xf32, #tpu.memory_space<vmem>>, vector<1x1x1x128xf32>,
    %cst_81 = arith.constant dense<0.000000e+00> : vector<128xf32>
    %130 = vector.multi_reduction <add>, %115, %cst_81 [0] : vector<8x128xf32> to vector<128xf32>
    %131 = vector.shape_cast %130 : vector<128xf32> to vector<1x128xf32>
    %c0_82 = arith.constant 0 : index
    %c0_83 = arith.constant 0 : index
    %c11 = arith.constant 11 : index
    %c0_84 = arith.constant 0 : index
    %132 = vector.load %arg4[%c0_82, %c0_83, %c11, %c0_84] : memref<1x1x12x128xf32, #tpu.memory_space<vmem>>, vector<1x1x1x128xf32>
    %133 = vector.shape_cast %132 : vector<1x1x1x128xf32> to vector<1x128xf32>
    %134 = vector.shape_cast %131 : vector<1x128xf32> to vector<1x1x1x128xf32>
    tpu.vector_store %arg4[%c0_82, %c0_83, %c11, %c0_84], %134 {strides = array<i32>} : memref<1x1x12x128xf32, #tpu.memory_space<vmem>>, vector<1x1x1x128xf32>,
    %c0_85 = arith.constant 0 : index
    %c0_86 = arith.constant 0 : index
    %135 = vector.load %arg6[%c0_85, %c0_86] : memref<8x128xf32, #tpu.memory_space<vmem>>, vector<8x128xf32>
    %136 = arith.subf %37, %113 : vector<8x128xf32>
    %137 = arith.addf %135, %136 : vector<8x128xf32>
    %c0_87 = arith.constant 0 : index
    %c0_88 = arith.constant 0 : index
    %138 = vector.load %arg6[%c0_87, %c0_88] : memref<8x128xf32, #tpu.memory_space<vmem>>, vector<8x128xf32>
    tpu.vector_store %arg6[%c0_87, %c0_88], %137 {strides = array<i32>} : memref<8x128xf32, #tpu.memory_space<vmem>>, vector<8x128xf32>,
    %c0_89 = arith.constant 0 : index
    %c0_90 = arith.constant 0 : index
    %139 = vector.load %arg7[%c0_89, %c0_90] : memref<8x128xf32, #tpu.memory_space<vmem>>, vector<8x128xf32>
    %140 = arith.addf %139, %8 : vector<8x128xf32>
    %c0_91 = arith.constant 0 : index
    %c0_92 = arith.constant 0 : index
    %141 = vector.load %arg7[%c0_91, %c0_92] : memref<8x128xf32, #tpu.memory_space<vmem>>, vector<8x128xf32>
    tpu.vector_store %arg7[%c0_91, %c0_92], %140 {strides = array<i32>} : memref<8x128xf32, #tpu.memory_space<vmem>>, vector<8x128xf32>,
    %c1_i32 = arith.constant 1 : i32
    %142 = arith.cmpi eq, %arg1, %c1_i32 : i32
    %143 = arith.extui %142 : i1 to i32
    %c0_i32_93 = arith.constant 0 : i32
    %144 = arith.cmpi ne, %143, %c0_i32_93 : i32
    scf.if %144 {
      %c0_94 = arith.constant 0 : index
      %c0_95 = arith.constant 0 : index
      %145 = vector.load %arg6[%c0_94, %c0_95] : memref<8x128xf32, #tpu.memory_space<vmem>>, vector<8x128xf32>
      %c0_96 = arith.constant 0 : index
      %c0_97 = arith.constant 0 : index
      %146 = vector.load %arg7[%c0_96, %c0_97] : memref<8x128xf32, #tpu.memory_space<vmem>>, vector<8x128xf32>
      %147 = arith.mulf %145, %146 : vector<8x128xf32>
      %cst_98 = arith.constant dense<0.000000e+00> : vector<128xf32>
      %148 = vector.multi_reduction <add>, %147, %cst_98 [0] : vector<8x128xf32> to vector<128xf32>
      %149 = vector.shape_cast %148 : vector<128xf32> to vector<1x128xf32>
      %c0_99 = arith.constant 0 : index
      %c0_100 = arith.constant 0 : index
      %c0_101 = arith.constant 0 : index
      %150 = vector.load %arg5[%c0_99, %c0_100, %c0_101] : memref<1x2x128xf32, #tpu.memory_space<vmem>>, vector<1x1x128xf32>
      %151 = vector.shape_cast %150 : vector<1x1x128xf32> to vector<1x128xf32>
      %152 = vector.shape_cast %149 : vector<1x128xf32> to vector<1x1x128xf32>
      tpu.vector_store %arg5[%c0_99, %c0_100, %c0_101], %152 {strides = array<i32>} : memref<1x2x128xf32, #tpu.memory_space<vmem>>, vector<1x1x128xf32>,
      %c0_102 = arith.constant 0 : index
      %c0_103 = arith.constant 0 : index
      %153 = vector.load %arg7[%c0_102, %c0_103] : memref<8x128xf32, #tpu.memory_space<vmem>>, vector<8x128xf32>
      %cst_104 = arith.constant dense<0.000000e+00> : vector<128xf32>
      %154 = vector.multi_reduction <add>, %153, %cst_104 [0] : vector<8x128xf32> to vector<128xf32>
      %155 = vector.shape_cast %154 : vector<128xf32> to vector<1x128xf32>
      %c0_105 = arith.constant 0 : index
      %c1_106 = arith.constant 1 : index
      %c0_107 = arith.constant 0 : index
      %156 = vector.load %arg5[%c0_105, %c1_106, %c0_107] : memref<1x2x128xf32, #tpu.memory_space<vmem>>, vector<1x1x128xf32>
      %157 = vector.shape_cast %156 : vector<1x1x128xf32> to vector<1x128xf32>
      %158 = vector.shape_cast %155 : vector<1x128xf32> to vector<1x1x128xf32>
      tpu.vector_store %arg5[%c0_105, %c1_106, %c0_107], %158 {strides = array<i32>} : memref<1x2x128xf32, #tpu.memory_space<vmem>>, vector<1x1x128xf32>,
    } else {
    }
    return
  }
  func.func @transform_0(%arg0: i32, %arg1: i32) -> (i32, i32, i32, i32) {
    %c0_i32 = arith.constant 0 : i32
    %c0_i32_0 = arith.constant 0 : i32
    %c0_i32_1 = arith.constant 0 : i32
    return %arg1, %c0_i32, %arg0, %c0_i32_0 : i32, i32, i32, i32
  }
  func.func @transform_1(%arg0: i32, %arg1: i32) -> (i32, i32, i32, i32) {
    %c0_i32 = arith.constant 0 : i32
    %c0_i32_0 = arith.constant 0 : i32
    %c0_i32_1 = arith.constant 0 : i32
    return %arg1, %c0_i32, %arg0, %c0_i32_0 : i32, i32, i32, i32
  }
  func.func @transform_2(%arg0: i32, %arg1: i32) -> (i32, i32, i32, i32) {
    %c0_i32 = arith.constant 0 : i32
    %c0_i32_0 = arith.constant 0 : i32
    %c0_i32_1 = arith.constant 0 : i32
    return %arg0, %arg1, %c0_i32, %c0_i32_0 : i32, i32, i32, i32
  }
  func.func @transform_3(%arg0: i32, %arg1: i32) -> (i32, i32, i32) {
    %c0_i32 = arith.constant 0 : i32
    %c0_i32_0 = arith.constant 0 : i32
    %c0_i32_1 = arith.constant 0 : i32
    return %arg0, %c0_i32, %c0_i32_0 : i32, i32, i32
  }
}

</mosaic_0001>

<llo_original>
// kernel: tpu_custom_call.1
$region0: #{tpu_custom_call.1}
  #allocation0 [shape = 'u32[]', space=smem, size = 0x4, offset = 0x4, fixed_abs, tag = 'smem constant byte address 0x4 - core index']
  #allocation1 [shape = 'u32[72,128]{1,0:T(1,128)}', space=vmem, size = 0x9000, scoped, tag = 'internal scratch']
  #allocation2 [shape = 'f32[8,128]{1,0:T(8,128)}', space=vmem, size = 0x1000, scoped, tag = 'scratch operand']
  #allocation3 [shape = 'f32[8,128]{1,0:T(8,128)}', space=vmem, size = 0x1000, scoped, tag = 'scratch operand']
  %s0 = inlined_call_operand.hbm [shape: bf16[2,4,8,128], index: 0, kind: input, shape index: {}]
  %s1 = inlined_call_operand.hbm [shape: bf16[2,2,8,128], index: 1, kind: input, shape index: {}]
  %s2 = inlined_call_operand.vmem [shape: f32[1,2,12,128], index: 2, kind: output, shape index: {0}]
  %s3 = inlined_call_operand.hbm [shape: f32[1,2,128], index: 3, kind: output, shape index: {1}]
  %4 = xla_tuple %s2, %s3
  %s5 = sld [smem:[#allocation0]]
  $region65: #{tpu_custom_call.1} parent=0
    _
  %s7 = ssub.s32 1, %s5
  %s8 = scalar_select 0, %s7, %s5
  $region1: #{tpu_custom_call.1} parent=0
    #allocation4 [shape = 'u8[16384]{0}', space=vmem, size = 0x4000, scoped, tag = 'input window, operand 0']
    #allocation5 [shape = 's32[2]{0}', space=sflag, size = 0x8, scoped, tag = 'scoped memory for tpu_custom_call.1']
    #allocation6 [shape = 's32[2]{0}', space=sflag, size = 0x8, scoped, tag = 'scoped memory for tpu_custom_call.1']
    #allocation7 [shape = 'u8[8192]{0}', space=vmem, size = 0x2000, scoped, tag = 'input window, operand 1']
    #allocation8 [shape = 's32[2]{0}', space=sflag, size = 0x8, scoped, tag = 'scoped memory for tpu_custom_call.1']
    #allocation9 [shape = 'u8[1024]{0}', space=vmem, size = 0x400, scoped, tag = 'output window, operand 1, single buffered']
    %9 = vsyncpa [#allocation5], 0
    %s10 = scalar_lea.sflag [#allocation5], 1
    %11 = vsyncpa %s10, 0
    %12 = vsyncpa [#allocation8], 0
    %s13 = scalar_lea.sflag [#allocation8], 1
    %14 = vsyncpa %s13, 0
    %15 = vsyncpa [#allocation6], 0
    loop: start=0, step=1, limit=4
    $region2: #{tpu_custom_call.1} parent=1 // loop_pre_header
      _
    $region3: #{tpu_custom_call.1} parent=1 // loop_header
      %s17 = sphi 0, %s21
      %p18 = scmp.ge.s32.totalorder %s17, 4
      %s24 = sphi 0, %s36
      %s25 = sphi 0, %s32
      %s26 = sphi 0, %s24
      %s27 = sphi 0, %s25
      %s28 = sphi 0, %s26
      %s29 = sphi 0, %s27
      %s41 = sphi 0, %s43
      %s44 = sphi 0, %s41
      %s45 = sphi 0, %s44
      %s61 = sphi 0, %s45
      %s69 = sphi 0, %s71
      %s72 = sphi 0, %s69
      %s73 = sphi 0, %s72
      %s89 = sphi 0, %s73
      %s97 = sphi 0, %s99
      %s100 = sphi 0, %s97
      %s101 = sphi 0, %s100
      %s117 = sphi 0, %s101
      %s123 = sphi 0, %s125
      %s126 = sphi 0, %s123
      %s127 = sphi 0, %s126
      %s143 = sphi 0, %s127
    $region4: #{tpu_custom_call.1} parent=1 // loop_header_branch
      %20 = sbr.rel (%p18) target = $region8
    $region5: #{tpu_custom_call.1} parent=1 // loop_body
      %s22 = ssub.s32 %s17, 1
      %s23 = ssub.s32 %s17, 2
      %s30 = sadd.s32 1, %s25
      %p31 = scmp.ge.s32.totalorder %s30, 2
      %s32 = scalar_select %p31, 0, %s30
      %s33 = sadd.s32 1, %s24
      %s34 = scalar_select %p31, %s33, %s24
      %p35 = scmp.ge.s32.totalorder %s34, 1
      %s36 = scalar_select %p35, 0, %s34
      %s37 = ssub.s32 %s25, %s32
      %s38 = ssub.s32 %s24, %s36
      %s39 = sor.u32 %s37, %s38
      %p40 = scmp.eq.s32.totalorder %s39, 0
      %s42 = sadd.s32 %s41, 1
      %s43 = scalar_select %p40, %s41, %s42
      %p46 = pneg %p40
      %p47 = scmp.eq.s32.totalorder %s17, 1
      %p48 = por %p46, %p47
      %p49 = scmp.ne.s32.totalorder %s41, %s44
      %p50 = scmp.eq.s32.totalorder %s17, 0
      %p51 = por %p49, %p50
      %p52 = scmp.ne.s32.totalorder %s41, %s44
      %p53 = scmp.eq.s32.totalorder %s22, 1
      %p54 = por %p52, %p53
      %p55 = scmp.ne.s32.totalorder %s44, %s45
      %p56 = scmp.eq.s32.totalorder %s22, 0
      %p57 = por %p55, %p56
      %p58 = scmp.ne.s32.totalorder %s44, %s45
      %p59 = scmp.eq.s32.totalorder %s23, 1
      %p60 = por %p58, %p59
      %p62 = scmp.ne.s32.totalorder %s45, %s61
      %p63 = scmp.eq.s32.totalorder %s23, 0
      %p64 = por %p62, %p63
      %s65 = ssub.s32 %s25, %s32
      %s66 = ssub.s32 %s24, %s36
      %s67 = sor.u32 %s65, %s66
      %p68 = scmp.eq.s32.totalorder %s67, 0
      %s70 = sadd.s32 %s69, 1
      %s71 = scalar_select %p68, %s69, %s70
      %p74 = pneg %p68
      %p75 = scmp.eq.s32.totalorder %s17, 1
      %p76 = por %p74, %p75
      %p77 = scmp.ne.s32.totalorder %s69, %s72
      %p78 = scmp.eq.s32.totalorder %s17, 0
      %p79 = por %p77, %p78
      %p80 = scmp.ne.s32.totalorder %s69, %s72
      %p81 = scmp.eq.s32.totalorder %s22, 1
      %p82 = por %p80, %p81
      %p83 = scmp.ne.s32.totalorder %s72, %s73
      %p84 = scmp.eq.s32.totalorder %s22, 0
      %p85 = por %p83, %p84
      %p86 = scmp.ne.s32.totalorder %s72, %s73
      %p87 = scmp.eq.s32.totalorder %s23, 1
      %p88 = por %p86, %p87
      %p90 = scmp.ne.s32.totalorder %s73, %s89
      %p91 = scmp.eq.s32.totalorder %s23, 0
      %p92 = por %p90, %p91
      %s93 = ssub.s32 %s24, %s36
      %s94 = ssub.s32 %s25, %s32
      %s95 = sor.u32 %s93, %s94
      %p96 = scmp.eq.s32.totalorder %s95, 0
      %s98 = sadd.s32 %s97, 1
      %s99 = scalar_select %p96, %s97, %s98
      %p102 = pneg %p96
      %p103 = scmp.eq.s32.totalorder %s17, 1
      %p104 = por %p102, %p103
      %p105 = scmp.ne.s32.totalorder %s97, %s100
      %p106 = scmp.eq.s32.totalorder %s17, 0
      %p107 = por %p105, %p106
      %p108 = scmp.ne.s32.totalorder %s97, %s100
      %p109 = scmp.eq.s32.totalorder %s22, 1
      %p110 = por %p108, %p109
      %p111 = scmp.ne.s32.totalorder %s100, %s101
      %p112 = scmp.eq.s32.totalorder %s22, 0
      %p113 = por %p111, %p112
      %p114 = scmp.ne.s32.totalorder %s100, %s101
      %p115 = scmp.eq.s32.totalorder %s23, 1
      %p116 = por %p114, %p115
      %p118 = scmp.ne.s32.totalorder %s101, %s117
      %p119 = scmp.eq.s32.totalorder %s23, 0
      %p120 = por %p118, %p119
      %s121 = ssub.s32 %s24, %s36
      %p122 = scmp.eq.s32.totalorder %s121, 0
      %s124 = sadd.s32 %s123, 1
      %s125 = scalar_select %p122, %s123, %s124
      %p128 = pneg %p122
      %p129 = scmp.eq.s32.totalorder %s17, 1
      %p130 = por %p128, %p129
      %p131 = scmp.ne.s32.totalorder %s123, %s126
      %p132 = scmp.eq.s32.totalorder %s17, 0
      %p133 = por %p131, %p132
      %p134 = scmp.ne.s32.totalorder %s123, %s126
      %p135 = scmp.eq.s32.totalorder %s22, 1
      %p136 = por %p134, %p135
      %p137 = scmp.ne.s32.totalorder %s126, %s127
      %p138 = scmp.eq.s32.totalorder %s22, 0
      %p139 = por %p137, %p138
      %p140 = scmp.ne.s32.totalorder %s126, %s127
      %p141 = scmp.eq.s32.totalorder %s23, 1
      %p142 = por %p140, %p141
      %p144 = scmp.ne.s32.totalorder %s127, %s143
      %p145 = scmp.eq.s32.totalorder %s23, 0
      %p146 = por %p144, %p145
      %p147 = scmp.le.s32.totalorder 1, %s17
      %p148 = scmp.lt.s32.totalorder %s17, 3
      %p149 = pnand %p147, %p148
      %p150 = pneg %p149
      // Predicated region
      $region9: #{tpu_custom_call.1} parent=5 // pred_check
        _
      $region10: #{tpu_custom_call.1} parent=5 // pred_check_branch
        %152 = sbr.rel (%p149) target = $region12
      $region11: #{tpu_custom_call.1} parent=5 // pred_region
        %s153 = ssub.s32 %s17, 1
      $region12: #{tpu_custom_call.1} parent=5 // pred_fallthru
        _
      %p154 = scmp.lt.s32.totalorder %s17, 2
      // Predicated region
      $region13: #{tpu_custom_call.1} parent=5 // pred_check
        %p155 = pneg %p154
      $region14: #{tpu_custom_call.1} parent=5 // pred_check_branch
        %157 = sbr.rel (%p155) target = $region16
      $region15: #{tpu_custom_call.1} parent=5 // pred_region
        // Predicated region
        $region17: #{tpu_custom_call.1} parent=15 // pred_check
          %p158 = pneg %p51
        $region18: #{tpu_custom_call.1} parent=15 // pred_check_branch
          %160 = sbr.rel (%p158) target = $region20
        $region19: #{tpu_custom_call.1} parent=15 // pred_region
          %s161 = sand.u32 %s41, 1
          %s162 = scalar_lea.sflag [#allocation5], %s161
          %s163 = sand.u32 %s41, 1
          %s164 = smul.addr %s163, 16
          %s165 = scalar_lea.vmem [#allocation4], %s164
          %167 = vsyncadd %s162, 0
          %s168 = smul.addr %s25, 4
          %s169 = sadd.s32 %s24, %s168
          %s170 = smul.addr %s169, 4
          %s171 = scalar_lea.hbm %s0, %s170
          %s172 = sshll.u32 %s171, 4
          %s173 = int_to_ptr.hbm [resolvable:$true] %s172
          %s174 = sshll.u32 %s165, 4
          %s175 = int_to_ptr.vmem [resolvable:$true] %s174
          %180 = dma.hbm_to_vmem [thread:$0]  %s173, 256, %s175, %s162, 64, 64, 4
        $region20: #{tpu_custom_call.1} parent=15 // pred_fallthru
          _
        // Predicated region
        $region21: #{tpu_custom_call.1} parent=15 // pred_check
          %p181 = pneg %p79
        $region22: #{tpu_custom_call.1} parent=15 // pred_check_branch
          %183 = sbr.rel (%p181) target = $region24
        $region23: #{tpu_custom_call.1} parent=15 // pred_region
          %s184 = sand.u32 %s69, 1
          %s185 = scalar_lea.sflag [#allocation8], %s184
          %s186 = sand.u32 %s69, 1
          %s187 = smul.addr %s186, 8
          %s188 = scalar_lea.vmem [#allocation7], %s187
          %190 = vsyncadd %s185, 0
          %s191 = smul.addr %s25, 2
          %s192 = sadd.s32 %s24, %s191
          %s193 = smul.addr %s192, 4
          %s194 = scalar_lea.hbm %s1, %s193
          %s195 = sshll.u32 %s194, 4
          %s196 = int_to_ptr.hbm [resolvable:$true] %s195
          %s197 = sshll.u32 %s188, 4
          %s198 = int_to_ptr.vmem [resolvable:$true] %s197
          %203 = dma.hbm_to_vmem [thread:$0]  %s196, 128, %s198, %s185, 64, 64, 4
        $region24: #{tpu_custom_call.1} parent=15 // pred_fallthru
          _
      $region16: #{tpu_custom_call.1} parent=5 // pred_fallthru
        _
      %p204 = scmp.le.s32.totalorder 1, %s17
      %p205 = scmp.lt.s32.totalorder %s17, 3
      %p206 = pnand %p204, %p205
      %p207 = pneg %p206
      // Predicated region
      $region25: #{tpu_custom_call.1} parent=5 // pred_check
        _
      $region26: #{tpu_custom_call.1} parent=5 // pred_check_branch
        %209 = sbr.rel (%p206) target = $region28
      $region27: #{tpu_custom_call.1} parent=5 // pred_region
        %s210 = ssub.s32 %s17, 1
        %s211 = sand.u32 %s44, 1
        %s212 = scalar_lea.sflag [#allocation5], %s211
        %s213 = sand.u32 %s44, 1
        %s214 = smul.addr %s213, 16
        %s215 = scalar_lea.vmem [#allocation4], %s214
        // Predicated region
        $region29: #{tpu_custom_call.1} parent=27 // pred_check
          %p216 = pneg %p57
        $region30: #{tpu_custom_call.1} parent=27 // pred_check_branch
          %218 = sbr.rel (%p216) target = $region32
        $region31: #{tpu_custom_call.1} parent=27 // pred_region
          %220 = dma.done %s212, 256
        $region32: #{tpu_custom_call.1} parent=27 // pred_fallthru
          _
        %s221 = sand.u32 %s72, 1
        %s222 = scalar_lea.sflag [#allocation8], %s221
        %s223 = sand.u32 %s72, 1
        %s224 = smul.addr %s223, 8
        %s225 = scalar_lea.vmem [#allocation7], %s224
        // Predicated region
        $region33: #{tpu_custom_call.1} parent=27 // pred_check
          %p226 = pneg %p85
        $region34: #{tpu_custom_call.1} parent=27 // pred_check_branch
          %228 = sbr.rel (%p226) target = $region36
        $region35: #{tpu_custom_call.1} parent=27 // pred_region
          %230 = dma.done %s222, 128
        $region36: #{tpu_custom_call.1} parent=27 // pred_fallthru
          _
        %s231 = sand.u32 %s44, 1
        %s232 = scalar_lea.sflag [#allocation5], %s231
        %s233 = sand.u32 %s44, 1
        %s234 = smul.addr %s233, 16
        %s235 = scalar_lea.vmem [#allocation4], %s234
        %p236 = pneg %p57
        %p237 = pneg %p54
        %s238 = sand.u32 %s72, 1
        %s239 = scalar_lea.sflag [#allocation8], %s238
        %s240 = sand.u32 %s72, 1
        %s241 = smul.addr %s240, 8
        %s242 = scalar_lea.vmem [#allocation7], %s241
        %p243 = pneg %p85
        %p244 = pneg %p82
        %p245 = pneg %p113
        %p246 = pneg %p110
        %p247 = scmp.lt.s32.totalorder %s26, 0
        %s248 = scalar_select %p247, %s26, 0
        %p249 = scmp.lt.s32.totalorder %s27, 1
        %s250 = scalar_select %p249, %s27, 1
        %s251 = smul.addr %s250, 2
        %s252 = smul.addr %s248, 4
        %s253 = sadd.s32 %s251, %s252
        %s254 = smul.addr %s253, 8
        %s255 = scalar_lea.vmem %s2, %s254
        %p256 = pneg %p139
        %p257 = pneg %p136
        %p258 = scmp.lt.s32.totalorder %s26, 0
        %s259 = scalar_select %p258, %s26, 0
        %p260 = scmp.lt.s32.totalorder %s27, 1
        %s261 = scalar_select %p260, %s27, 1
        %s262 = smul.addr %s261, 2
        %s263 = smul.addr %s259, 4
        %s264 = sadd.s32 %s262, %s263
        %s265 = smul.addr %s264, 8
        %s266 = scalar_lea.vmem %s2, %s265
        %p267 = scmp.eq.s32.totalorder %s27, 0
        // Predicated region
        $region37: #{tpu_custom_call.1} parent=27 // pred_check
          %p268 = pneg %p267
        $region38: #{tpu_custom_call.1} parent=27 // pred_check_branch
          %270 = sbr.rel (%p268) target = $region40
        $region39: #{tpu_custom_call.1} parent=27 // pred_region
          %271 = vst [vmem:[#allocation2] sm:$0xff] 0.0
          %272 = vst [vmem:[#allocation3] sm:$0xff] 0.0
        $region40: #{tpu_custom_call.1} parent=27 // pred_fallthru
          _
        %v273 = vld [vmem:[%s225] sm:$0xf]
        %v274 = vunpack.c.l.bf16 %v273
        %s275 = scalar_lea.vmem %s225, 4 [#allocation7]
        %v276 = vld [vmem:[%s275] sm:$0xf]
        %v277 = vunpack.c.l.bf16 %v276
        %v278 = vld [vmem:[%s215] sm:$0xf]
        %v279 = vunpack.c.l.bf16 %v278
        %s280 = scalar_lea.vmem %s215, 4 [#allocation4]
        %v281 = vld [vmem:[%s280] sm:$0xf]
        %v282 = vunpack.c.l.bf16 %v281
        %s283 = scalar_lea.vmem %s215, 8 [#allocation4]
        %v284 = vld [vmem:[%s283] sm:$0xf]
        %v285 = vunpack.c.l.bf16 %v284
        %s286 = scalar_lea.vmem %s215, 12 [#allocation4]
        %v287 = vld [vmem:[%s286] sm:$0xf]
        %v288 = vunpack.c.l.bf16 %v287
        %v289 = vmax.f32 %v279, %v282
        %v290 = vmax.f32 %v289, %v285
        %v291 = vmax.f32 %v290, %v288
        %v292 = vsub.f32 %v279, %v291
        %v293 = vmul.f32 %v292, 1.442695
        %v294 = vpow.pop %v293
        %v295 = vsub.f32 %v282, %v291
        %v296 = vmul.f32 %v295, 1.442695
        %v297 = vpow.pop %v296
        %v298 = vsub.f32 %v285, %v291
        %v299 = vmul.f32 %v298, 1.442695
        %v300 = vpow.pop %v299
        %v301 = vsub.f32 %v288, %v291
        %v302 = vmul.f32 %v301, 1.442695
        %v303 = vpow.pop %v302
        %v304 = vadd.f32 %v294, %v297
        %v305 = vadd.f32 %v304, %v300
        %v306 = vadd.f32 %v305, %v303
        %v307 = vrcp.pop %v306
        %v308 = vmul.f32 %v306, %v307
        %v309 = vsub.f32 1.0, %v308
        %v310 = vmul.f32 %v307, %v309
        %v311 = vadd.f32 %v307, %v310
        %vm312 = vweird.f32 %v306
        %vm313 = vweird.f32 %v307
        %vm314 = vmor %vm312, %vm313
        %v315 = vsel %vm314, %v307, %v311
        %v316 = vand.u32 2147483647, %v306
        %vm317 = vcmp.eq.f32.partialorder %v316, 8.507059e+37
        %v318 = vand.u32 %v306, 2147483648
        %v319 = vor.u32 1.1754944e-38, %v318
        %v320 = vsel %vm317, %v319, %v315
        %v321 = vlog2.pop %v306
        %v322 = vmul.f32 %v321, 0.6931472
        %v323 = vadd.f32 %v291, %v322
        %vm324 = vcmp.eq.f32.partialorder %v274, 0.0
        %v325 = vsel %vm324, %v279, 0.0
        %v326 = vsel %vm324, %v277, 0.0
        %v327 = vmul.f32 %v294, %v320
        %v328 = vmul.f32 %v327, %v277
        %v329 = vsel %vm324, %v328, 0.0
        %v330 = vrot.slane %v329, 4
        %v331 = vadd.f32 %v329, %v330
        %v332 = vrot.slane %v331, 2
        %v333 = vadd.f32 %v331, %v332
        %v334 = vrot.slane %v333, 1
        %v335 = vadd.f32 %v333, %v334
        %336 = vst [vmem:[%s266] sm:$0x1] %v335
        %v337 = vrot.slane %v328, 4
        %v338 = vadd.f32 %v328, %v337
        %v339 = vrot.slane %v338, 2
        %v340 = vadd.f32 %v338, %v339
        %v341 = vrot.slane %v340, 1
        %v342 = vadd.f32 %v340, %v341
        %343 = vst [vmem:[%s266 + $0x4] sm:$0x1] %v342
        %v344 = vrot.slane %v326, 4
        %v345 = vadd.f32 %v326, %v344
        %v346 = vrot.slane %v345, 2
        %v347 = vadd.f32 %v345, %v346
        %v348 = vrot.slane %v347, 1
        %v349 = vadd.f32 %v347, %v348
        %350 = vst [vmem:[%s266 + $0x8] sm:$0x1] %v349
        %vm351 = vcmp.eq.f32.partialorder %v274, 1.0
        %v352 = vsel %vm351, %v282, %v325
        %v353 = vsel %vm351, %v277, 0.0
        %v354 = vmul.f32 %v297, %v320
        %v355 = vmul.f32 %v354, %v277
        %v356 = vsel %vm351, %v355, 0.0
        %v357 = vrot.slane %v356, 4
        %v358 = vadd.f32 %v356, %v357
        %v359 = vrot.slane %v358, 2
        %v360 = vadd.f32 %v358, %v359
        %v361 = vrot.slane %v360, 1
        %v362 = vadd.f32 %v360, %v361
        %363 = vst [vmem:[%s266 + $0x1] sm:$0x1] %v362
        %v364 = vrot.slane %v355, 4
        %v365 = vadd.f32 %v355, %v364
        %v366 = vrot.slane %v365, 2
        %v367 = vadd.f32 %v365, %v366
        %v368 = vrot.slane %v367, 1
        %v369 = vadd.f32 %v367, %v368
        %370 = vst [vmem:[%s266 + $0x5] sm:$0x1] %v369
        %v371 = vrot.slane %v353, 4
        %v372 = vadd.f32 %v353, %v371
        %v373 = vrot.slane %v372, 2
        %v374 = vadd.f32 %v372, %v373
        %v375 = vrot.slane %v374, 1
        %v376 = vadd.f32 %v374, %v375
        %377 = vst [vmem:[%s266 + $0x9] sm:$0x1] %v376
        %vm378 = vcmp.eq.f32.partialorder %v274, 2.0
        %v379 = vsel %vm378, %v285, %v352
        %v380 = vsel %vm378, %v277, 0.0
        %v381 = vmul.f32 %v300, %v320
        %v382 = vmul.f32 %v381, %v277
        %v383 = vsel %vm378, %v382, 0.0
        %v384 = vrot.slane %v383, 4
        %v385 = vadd.f32 %v383, %v384
        %v386 = vrot.slane %v385, 2
        %v387 = vadd.f32 %v385, %v386
        %v388 = vrot.slane %v387, 1
        %v389 = vadd.f32 %v387, %v388
        %390 = vst [vmem:[%s266 + $0x2] sm:$0x1] %v389
        %v391 = vrot.slane %v382, 4
        %v392 = vadd.f32 %v382, %v391
        %v393 = vrot.slane %v392, 2
        %v394 = vadd.f32 %v392, %v393
        %v395 = vrot.slane %v394, 1
        %v396 = vadd.f32 %v394, %v395
        %397 = vst [vmem:[%s266 + $0x6] sm:$0x1] %v396
        %v398 = vrot.slane %v380, 4
        %v399 = vadd.f32 %v380, %v398
        %v400 = vrot.slane %v399, 2
        %v401 = vadd.f32 %v399, %v400
        %v402 = vrot.slane %v401, 1
        %v403 = vadd.f32 %v401, %v402
        %404 = vst [vmem:[%s266 + $0xa] sm:$0x1] %v403
        %vm405 = vcmp.eq.f32.partialorder %v274, 3.0
        %v406 = vsel %vm405, %v288, %v379
        %v407 = vsel %vm405, %v277, 0.0
        %v408 = vmul.f32 %v303, %v320
        %v409 = vmul.f32 %v408, %v277
        %v410 = vsel %vm405, %v409, 0.0
        %v411 = vrot.slane %v410, 4
        %v412 = vadd.f32 %v410, %v411
        %v413 = vrot.slane %v412, 2
        %v414 = vadd.f32 %v412, %v413
        %v415 = vrot.slane %v414, 1
        %v416 = vadd.f32 %v414, %v415
        %417 = vst [vmem:[%s266 + $0x3] sm:$0x1] %v416
        %v418 = vrot.slane %v409, 4
        %v419 = vadd.f32 %v409, %v418
        %v420 = vrot.slane %v419, 2
        %v421 = vadd.f32 %v419, %v420
        %v422 = vrot.slane %v421, 1
        %v423 = vadd.f32 %v421, %v422
        %424 = vst [vmem:[%s266 + $0x7] sm:$0x1] %v423
        %v425 = vrot.slane %v407, 4
        %v426 = vadd.f32 %v407, %v425
        %v427 = vrot.slane %v426, 2
        %v428 = vadd.f32 %v426, %v427
        %v429 = vrot.slane %v428, 1
        %v430 = vadd.f32 %v428, %v429
        %431 = vst [vmem:[%s266 + $0xb] sm:$0x1] %v430
        %v432 = vld [vmem:[#allocation2] sm:$0xff]
        %v433 = vsub.f32 %v323, %v406
        %v434 = vadd.f32 %v432, %v433
        %435 = vst [vmem:[#allocation2] sm:$0xff] %v434
        %v436 = vld [vmem:[#allocation3] sm:$0xff]
        %v437 = vadd.f32 %v436, %v277
        %438 = vst [vmem:[#allocation3] sm:$0xff] %v437
        %p439 = scmp.eq.s32.totalorder %s27, 1
        // Predicated region
        $region41: #{tpu_custom_call.1} parent=27 // pred_check
          %p440 = pneg %p439
        $region42: #{tpu_custom_call.1} parent=27 // pred_check_branch
          %442 = sbr.rel (%p440) target = $region44
        $region43: #{tpu_custom_call.1} parent=27 // pred_region
          %v443 = vld [vmem:[#allocation2] sm:$0xff]
          %v444 = vld [vmem:[#allocation3] sm:$0xff]
          %v445 = vmul.f32 %v443, %v444
          %v446 = vrot.slane %v445, 4
          %v447 = vadd.f32 %v445, %v446
          %v448 = vrot.slane %v447, 2
          %v449 = vadd.f32 %v447, %v448
          %v450 = vrot.slane %v449, 1
          %v451 = vadd.f32 %v449, %v450
          %452 = vst [vmem:[#allocation9] sm:$0x1] %v451
          %v453 = vld [vmem:[#allocation3] sm:$0xff]
          %v454 = vrot.slane %v453, 4
          %v455 = vadd.f32 %v453, %v454
          %v456 = vrot.slane %v455, 2
          %v457 = vadd.f32 %v455, %v456
          %v458 = vrot.slane %v457, 1
          %v459 = vadd.f32 %v457, %v458
          %460 = vst [vmem:[#allocation9 + $0x1] sm:$0x1] %v459
        $region44: #{tpu_custom_call.1} parent=27 // pred_fallthru
          _
        %p461 = scmp.lt.s32.totalorder %s26, 0
        %s462 = scalar_select %p461, %s26, 0
        %p463 = scmp.lt.s32.totalorder %s27, 1
        %s464 = scalar_select %p463, %s27, 1
        %s465 = smul.addr %s464, 2
        %s466 = smul.addr %s462, 4
        %s467 = sadd.s32 %s465, %s466
        %s468 = smul.addr %s467, 8
        %s469 = scalar_lea.vmem %s2, %s468
        // Predicated region
        $region45: #{tpu_custom_call.1} parent=27 // pred_check
          %p470 = pneg %p110
        $region46: #{tpu_custom_call.1} parent=27 // pred_check_branch
          %472 = sbr.rel (%p470) target = $region48
        $region47: #{tpu_custom_call.1} parent=27 // pred_region
          _
        $region48: #{tpu_custom_call.1} parent=27 // pred_fallthru
          _
        // Predicated region
        $region49: #{tpu_custom_call.1} parent=27 // pred_check
          %p473 = pneg %p136
        $region50: #{tpu_custom_call.1} parent=27 // pred_check_branch
          %475 = sbr.rel (%p473) target = $region52
        $region51: #{tpu_custom_call.1} parent=27 // pred_region
          %477 = vsyncadd [#allocation6], 0
          %s478 = smul.addr %s26, 2
          %s479 = scalar_lea.hbm %s3, %s478
          %s481 = sshll.u32 [#allocation9], 4
          %s482 = int_to_ptr.vmem [resolvable:$true] %s481
          %s483 = sshll.u32 %s479, 4
          %s484 = int_to_ptr.hbm [resolvable:$true] %s483
          %486 = dma.vmem_to_hbm [thread:$0]  %s482, 32, %s484, [#allocation6]
        $region52: #{tpu_custom_call.1} parent=27 // pred_fallthru
          _
        // Predicated region
        $region53: #{tpu_custom_call.1} parent=27 // pred_check
          %p487 = pneg %p136
        $region54: #{tpu_custom_call.1} parent=27 // pred_check_branch
          %489 = sbr.rel (%p487) target = $region56
        $region55: #{tpu_custom_call.1} parent=27 // pred_region
          %491 = dma.done [#allocation6], 32
        $region56: #{tpu_custom_call.1} parent=27 // pred_fallthru
          _
      $region28: #{tpu_custom_call.1} parent=5 // pred_fallthru
        _
      %p492 = scmp.le.s32.totalorder 2, %s17
      // Predicated region
      $region57: #{tpu_custom_call.1} parent=5 // pred_check
        %p493 = pneg %p492
      $region58: #{tpu_custom_call.1} parent=5 // pred_check_branch
        %495 = sbr.rel (%p493) target = $region60
      $region59: #{tpu_custom_call.1} parent=5 // pred_region
        %s496 = ssub.s32 %s17, 2
        // Predicated region
        $region61: #{tpu_custom_call.1} parent=59 // pred_check
          %p497 = pneg %p116
        $region62: #{tpu_custom_call.1} parent=59 // pred_check_branch
          %499 = sbr.rel (%p497) target = $region64
        $region63: #{tpu_custom_call.1} parent=59 // pred_region
          %p500 = scmp.lt.s32.totalorder %s28, 0
          %s501 = scalar_select %p500, %s28, 0
          %p502 = scmp.lt.s32.totalorder %s29, 1
          %s503 = scalar_select %p502, %s29, 1
          %s504 = smul.addr %s503, 2
          %s505 = smul.addr %s501, 4
          %s506 = sadd.s32 %s504, %s505
          %s507 = smul.addr %s506, 8
          %s508 = scalar_lea.vmem %s2, %s507
        $region64: #{tpu_custom_call.1} parent=59 // pred_fallthru
          _
      $region60: #{tpu_custom_call.1} parent=5 // pred_fallthru
        _
    $region6: #{tpu_custom_call.1} parent=1 // loop_footer
      %s21 = sadd.s32 1, %s17
    $region7: #{tpu_custom_call.1} parent=1 // loop_footer_branch
      %16 = sbr.rel target = $region3
    $region8: #{tpu_custom_call.1} parent=1 // loop_exit
      _
    %509 = vsyncpa [#allocation5], 1
    %s510 = scalar_lea.sflag [#allocation5], 1
    %511 = vsyncpa %s510, 1
    %512 = vsyncpa [#allocation8], 1
    %s513 = scalar_lea.sflag [#allocation8], 1
    %514 = vsyncpa %s513, 1
    %515 = vsyncpa [#allocation6], 1
    %s516 = scalar_lea.sflag [#allocation6], 1
    %517 = vsyncpa %s516, 1

</llo_original>
